<compile_context>
chip_gen: v6e
topology: v6e:2x2x1
jax: 0.10.0
libtpu: 0.0.40
codegen_flags: <defaults>
</compile_context>

<pallas_src>
import jax
import jax.numpy as jnp
from jax.experimental import pallas as pl
from jax.experimental.pallas import tpu as pltpu


def _encoder_kernel(x_ref, w_ref, b_ref, o_ref):
    """Fused conv1d(k=3, pad=1) + ReLU + max-pool over L for one batch tile.

    x_ref: (TB, L, E)  unpadded input tile (padding handled here, in VMEM)
    w_ref: (3E, H)     im2col conv weights, tap-major along K
    b_ref: (1, H)      conv bias (f32)
    o_ref: (TB, H)     pooled output
    """
    tb, L, E = x_ref.shape
    H = o_ref.shape[-1]
    cdt = w_ref.dtype                     # compute dtype (f32 or bf16)

    x = x_ref[...].astype(cdt)                                    # (TB, L, E)
    zrow = jnp.zeros((tb, 1, E), dtype=cdt)

    # Zero-padded 3-tap window: x[l-1], x[l], x[l+1] (per batch element).
    x_prev = jnp.concatenate([zrow, x[:, :L - 1, :]], axis=1)     # (TB, L, E)
    x_next = jnp.concatenate([x[:, 1:, :], zrow], axis=1)         # (TB, L, E)

    # im2col: one big MXU matmul (M = TB*L, K = 3E) instead of 3 small ones.
    lhs = jnp.concatenate([x_prev, x, x_next], axis=2)            # (TB, L, 3E)
    lhs = lhs.reshape(tb * L, 3 * E)
    acc = jnp.dot(lhs, w_ref[...], preferred_element_type=jnp.float32)
    acc = acc.reshape(tb, L, H)                                   # (TB, L, H)

    # MaxPool over L first, then bias + ReLU (valid: bias constant over L,
    # ReLU monotone => max(relu(c+b)) == relu(max(c)+b)).
    pooled = jnp.max(acc, axis=1)                                 # (TB, H)
    o_ref[...] = jnp.maximum(pooled + b_ref[...], 0.0).astype(o_ref.dtype)


def prepare_encoder_params(conv_w, conv_b, compute_dtype=jnp.float32):
    """One-time (parameter-load-time) repack of the PyTorch Conv1d params.

    conv_w: (H, E, 3) PyTorch Conv1d weight layout; conv_b: (H,).
    Returns (w_im2col (3E, H) in compute_dtype, bias (1, H) f32).
    Use compute_dtype=jnp.bfloat16 on v6e / v7x for MXU throughput.
    """
    H, E, K = conv_w.shape
    w = jnp.transpose(conv_w, (2, 1, 0)).reshape(K * E, H)        # tap-major K
    return w.astype(compute_dtype), conv_b.reshape(1, H).astype(jnp.float32)


def encoder_cnn(inputs, w_im2col, bias2d, *, block_b=None):
    """inputs: (B, L, E) f32; w_im2col: (3E, H); bias2d: (1, H) f32."""
    B, L, E = inputs.shape
    K3, H = w_im2col.shape
    if block_b is None:
        # Fold the whole batch into one grid step (overhead-bound problem;
        # VMEM use is KBs). On v7x with large B, pick block_b = B // 2 (kept a
        # multiple of 8) so both TensorCores get a grid step.
        block_b = B
    assert B % block_b == 0, "batch must be divisible by block_b"

    return pl.pallas_call(
        _encoder_kernel,
        out_shape=jax.ShapeDtypeStruct((B, H), jnp.float32),
        grid_spec=pltpu.PrefetchScalarGridSpec(
            num_scalar_prefetch=0,
            grid=(B // block_b,),
            in_specs=[
                pl.BlockSpec((block_b, L, E), lambda i: (i, 0, 0)),  # batch tile
                pl.BlockSpec((K3, H), lambda i: (0, 0)),             # im2col W
                pl.BlockSpec((1, H), lambda i: (0, 0)),              # bias
            ],
            out_specs=pl.BlockSpec((block_b, H), lambda i: (i, 0)),
        ),
        compiler_params=pltpu.CompilerParams(
            dimension_semantics=("parallel",)),
    )(inputs, w_im2col, bias2d)


def _reference(inputs, conv_w, conv_b):
    # Pure-JAX reference of the PyTorch forward (conv + relu + maxpool).
    L = inputs.shape[1]
    x_pad = jnp.pad(inputs, ((0, 0), (1, 1), (0, 0)))             # (B, L+2, E)
    w = jnp.transpose(conv_w, (2, 1, 0))                          # (3, E, H)
    acc = (jnp.einsum('ble,eh->blh', x_pad[:, 0:L, :], w[0]) +
           jnp.einsum('ble,eh->blh', x_pad[:, 1:L + 1, :], w[1]) +
           jnp.einsum('ble,eh->blh', x_pad[:, 2:L + 2, :], w[2]) +
           conv_b[None, None, :])
    return jnp.max(jnp.maximum(acc, 0.0), axis=1)                 # (B, H)


if __name__ == "__main__":
    # Small, module-consistent shapes:
    #   word_embedding_dim=50, pos_embedding_dim=5 -> E = 50 + 2*5 = 60
    #   max_length (L) = 16, hidden_size (H) = 32, batch = 8
    B, L = 8, 16
    word_dim, pos_dim, H = 50, 5, 32
    E = word_dim + 2 * pos_dim

    key = jax.random.PRNGKey(0)
    k_x, k_w, k_b = jax.random.split(key, 3)
    inputs = jax.random.normal(k_x, (B, L, E), dtype=jnp.float32)
    # PyTorch Conv1d weight layout: (H, E, 3)
    conv_w = jax.random.normal(k_w, (H, E, 3), dtype=jnp.float32) * 0.1
    conv_b = jax.random.normal(k_b, (H,), dtype=jnp.float32) * 0.1

    ref = _reference(inputs, conv_w, conv_b)

    # f32 MXU operands: exact-ish check against the reference.
    w32, b2d = prepare_encoder_params(conv_w, conv_b, jnp.float32)
    out32 = jax.block_until_ready(encoder_cnn(inputs, w32, b2d))
    assert out32.shape == (B, H)
    assert jnp.allclose(out32, ref, atol=1e-4, rtol=1e-4)

    # bf16 MXU operands (v6e / v7x fast path), f32 accumulation: loose check.
    wbf, b2d_bf = prepare_encoder_params(conv_w, conv_b, jnp.bfloat16)
    outbf = jax.block_until_ready(encoder_cnn(inputs, wbf, b2d_bf))
    assert outbf.shape == (B, H)
    assert jnp.allclose(outbf, ref, atol=1e-1, rtol=1e-1)

    # TODO(synk): the `pcnn` method (piecewise pooling with mask_embedding) is
    # not part of forward() and is not implemented here.
    print("KERNEL_OK")
</pallas_src>

<mosaic_0001>
module attributes {stable_mosaic.version = 11 : i64} {
  func.func @_encoder_kernel(%arg0: i32, %arg1: memref<8x16x60xf32, #tpu.memory_space<vmem>>, %arg2: memref<180x32xf32, #tpu.memory_space<vmem>>, %arg3: memref<1x32xf32, #tpu.memory_space<vmem>>, %arg4: memref<8x32xf32, #tpu.memory_space<vmem>>) attributes {dimension_semantics = [#tpu.dimension_semantics<parallel>], iteration_bounds = array<i64: 1>, scalar_prefetch = 0 : i64, scratch_operands = 0 : i64, tpu.core_type = #tpu.core_type<tc>, window_params = [{transform_indices = @transform_0, window_bounds = array<i64: 8, 16, 60>}, {pipeline_mode = #tpu.pipeline_mode<synchronous>, transform_indices = @transform_1, window_bounds = array<i64: 180, 32>}, {pipeline_mode = #tpu.pipeline_mode<synchronous>, transform_indices = @transform_2, window_bounds = array<i64: 1, 32>}, {transform_indices = @transform_3, window_bounds = array<i64: 8, 32>}]} {
    %c0 = arith.constant 0 : index
    %c0_0 = arith.constant 0 : index
    %c0_1 = arith.constant 0 : index
    %0 = vector.load %arg1[%c0, %c0_0, %c0_1] : memref<8x16x60xf32, #tpu.memory_space<vmem>>, vector<8x16x60xf32>
    %cst = arith.constant 0.000000e+00 : f32
    %1 = vector.broadcast %cst : f32 to vector<8x1x60xf32>
    %2 = vector.extract_strided_slice %0 {offsets = [0, 0, 0], sizes = [8, 15, 60], strides = [1, 1, 1]} : vector<8x16x60xf32> to vector<8x15x60xf32>
    %3 = tpu.concatenate %1, %2 in 1 : vector<8x1x60xf32>, vector<8x15x60xf32> -> vector<8x16x60xf32>
    %4 = vector.extract_strided_slice %0 {offsets = [0, 1, 0], sizes = [8, 15, 60], strides = [1, 1, 1]} : vector<8x16x60xf32> to vector<8x15x60xf32>
    %5 = tpu.concatenate %4, %1 in 1 : vector<8x15x60xf32>, vector<8x1x60xf32> -> vector<8x16x60xf32>
    %6 = tpu.concatenate %3, %0, %5 in 2 : vector<8x16x60xf32>, vector<8x16x60xf32>, vector<8x16x60xf32> -> vector<8x16x180xf32>
    %7 = vector.shape_cast %6 : vector<8x16x180xf32> to vector<128x180xf32>
    %c0_2 = arith.constant 0 : index
    %c0_3 = arith.constant 0 : index
    %8 = vector.load %arg2[%c0_2, %c0_3] : memref<180x32xf32, #tpu.memory_space<vmem>>, vector<180x32xf32>
    %cst_4 = arith.constant dense<0.000000e+00> : vector<128x32xf32>
    %9 = tpu.matmul %7, %8, %cst_4 {dimension_numbers = #tpu.dot_dimension_numbers<[1], [0], [0], [1], [0, 0, 1, 1], [], []>} : vector<128x180xf32>, vector<180x32xf32>, vector<128x32xf32> -> vector<128x32xf32>
    %10 = vector.shape_cast %9 : vector<128x32xf32> to vector<8x16x32xf32>
    %cst_5 = arith.constant dense<0xFF800000> : vector<8x32xf32>
    %11 = vector.multi_reduction <maximumf>, %10, %cst_5 [1] : vector<8x16x32xf32> to vector<8x32xf32>
    %c0_6 = arith.constant 0 : index
    %c0_7 = arith.constant 0 : index
    %12 = vector.load %arg3[%c0_6, %c0_7] : memref<1x32xf32, #tpu.memory_space<vmem>>, vector<1x32xf32>
    %13 = vector.broadcast %12 : vector<1x32xf32> to vector<8x32xf32>
    %14 = arith.addf %11, %13 : vector<8x32xf32>
    %cst_8 = arith.constant 0.000000e+00 : f32
    %15 = vector.broadcast %cst_8 : f32 to vector<8x32xf32>
    %16 = arith.maximumf %14, %15 : vector<8x32xf32>
    %c0_9 = arith.constant 0 : index
    %c0_10 = arith.constant 0 : index
    %17 = vector.load %arg4[%c0_9, %c0_10] : memref<8x32xf32, #tpu.memory_space<vmem>>, vector<8x32xf32>
    tpu.vector_store %arg4[%c0_9, %c0_10], %16 {strides = array<i32>} : memref<8x32xf32, #tpu.memory_space<vmem>>, vector<8x32xf32>,
    return
  }
  func.func @transform_0(%arg0: i32) -> (i32, i32, i32) {
    %c0_i32 = arith.constant 0 : i32
    %c0_i32_0 = arith.constant 0 : i32
    %c0_i32_1 = arith.constant 0 : i32
    return %arg0, %c0_i32, %c0_i32_0 : i32, i32, i32
  }
  func.func @transform_1(%arg0: i32) -> (i32, i32) {
    %c0_i32 = arith.constant 0 : i32
    %c0_i32_0 = arith.constant 0 : i32
    %c0_i32_1 = arith.constant 0 : i32
    return %c0_i32, %c0_i32_0 : i32, i32
  }
  func.func @transform_2(%arg0: i32) -> (i32, i32) {
    %c0_i32 = arith.constant 0 : i32
    %c0_i32_0 = arith.constant 0 : i32
    %c0_i32_1 = arith.constant 0 : i32
    return %c0_i32, %c0_i32_0 : i32, i32
  }
  func.func @transform_3(%arg0: i32) -> (i32, i32) {
    %c0_i32 = arith.constant 0 : i32
    %c0_i32_0 = arith.constant 0 : i32
    return %arg0, %c0_i32 : i32, i32
  }
}

</mosaic_0001>

<llo_original>
// kernel: tpu_custom_call.1
$region0: #{tpu_custom_call.1}
  #allocation0 [shape = 'u32[]', space=smem, size = 0x4, offset = 0x4, fixed_abs, tag = 'smem constant byte address 0x4 - core index']
  #allocation1 [shape = 'u32[144,128]{1,0:T(1,128)}', space=vmem, size = 0x12000, scoped, tag = 'internal scratch']
  %s0 = inlined_call_operand.vmem [shape: f32[8,16,60], index: 0, kind: input, shape index: {}]
  %s1 = inlined_call_operand.vmem [shape: f32[180,32], index: 1, kind: input, shape index: {}]
  %s2 = inlined_call_operand.vmem [shape: f32[1,32], index: 2, kind: input, shape index: {}]
  %s3 = inlined_call_operand.hbm [shape: f32[8,32], index: 3, kind: output, shape index: {}]
  %s4 = sld [smem:[#allocation0]]
  $region22: #{tpu_custom_call.1} parent=0
    _
  %s6 = ssub.s32 1, %s4
  %s7 = scalar_select 0, %s6, %s4
  $region1: #{tpu_custom_call.1} parent=0
    #allocation2 [shape = 'u8[4096]{0}', space=vmem, size = 0x1000, scoped, tag = 'output window, operand 0, single buffered']
    #allocation3 [shape = 's32[1]{0}', space=sflag, size = 0x4, scoped, tag = 'scoped memory for tpu_custom_call.1']
    %8 = vsyncpa [#allocation3], 0
    // Predicated region
    $region2: #{tpu_custom_call.1} parent=1 // pred_check
      _
    $region3: #{tpu_custom_call.1} parent=1 // pred_check_branch
      %10 = sbr.rel (0) target = $region5
    $region4: #{tpu_custom_call.1} parent=1 // pred_region
      _
    $region5: #{tpu_custom_call.1} parent=1 // pred_fallthru
      _
    // Predicated region
    $region6: #{tpu_custom_call.1} parent=1 // pred_check
      _
    $region7: #{tpu_custom_call.1} parent=1 // pred_check_branch
      %12 = sbr.rel (0) target = $region9
    $region8: #{tpu_custom_call.1} parent=1 // pred_region
      _
    $region9: #{tpu_custom_call.1} parent=1 // pred_fallthru
      _
    // Predicated region
    $region10: #{tpu_custom_call.1} parent=1 // pred_check
      _
    $region11: #{tpu_custom_call.1} parent=1 // pred_check_branch
      %14 = sbr.rel (0) target = $region13
    $region12: #{tpu_custom_call.1} parent=1 // pred_region
      _
    $region13: #{tpu_custom_call.1} parent=1 // pred_fallthru
      _
    %v15 = vld [vmem:[%s0] sm:$0xff]
    %v16 = vld [vmem:[%s0 + $0x8] sm:$0xff]
    %v17 = vld [vmem:[%s0 + $0x10] sm:$0xff]
    %v18 = vld [vmem:[%s0 + $0x18] sm:$0xff]
    %v19 = vld [vmem:[%s0 + $0x20] sm:$0xff]
    %v20 = vld [vmem:[%s0 + $0x28] sm:$0xff]
    %v21 = vld [vmem:[%s0 + $0x30] sm:$0xff]
    %v22 = vld [vmem:[%s0 + $0x38] sm:$0xff]
    %v23 = vld [vmem:[%s0 + $0x40] sm:$0xff]
    %v24 = vld [vmem:[%s0 + $0x48] sm:$0xff]
    %v25 = vld [vmem:[%s0 + $0x50] sm:$0xff]
    %v26 = vld [vmem:[%s0 + $0x58] sm:$0xff]
    %v27 = vld [vmem:[%s0 + $0x60] sm:$0xff]
    %v28 = vld [vmem:[%s0 + $0x68] sm:$0xff]
    %v29 = vld [vmem:[%s0 + $0x70] sm:$0xff]
    %v30 = vld [vmem:[%s0 + $0x78] sm:$0xff]
    %vm47 = vcmask 1040384
    %v48 = vrot.slane %v15, 7
    %v49 = vrot.slane %v16, 7
    %v50 = vsel %vm47, %v48, %v49
    %v51 = vrot.slane %v17, 7
    %v52 = vrot.slane %v18, 7
    %v53 = vsel %vm47, %v51, %v52
    %v54 = vrot.slane %v19, 7
    %v55 = vrot.slane %v20, 7
    %v56 = vsel %vm47, %v54, %v55
    %v57 = vrot.slane %v21, 7
    %v58 = vrot.slane %v22, 7
    %v59 = vsel %vm47, %v57, %v58
    %v60 = vrot.slane %v23, 7
    %v61 = vrot.slane %v24, 7
    %v62 = vsel %vm47, %v60, %v61
    %v63 = vrot.slane %v25, 7
    %v64 = vrot.slane %v26, 7
    %v65 = vsel %vm47, %v63, %v64
    %v66 = vrot.slane %v27, 7
    %v67 = vrot.slane %v28, 7
    %v68 = vsel %vm47, %v66, %v67
    %v69 = vrot.slane %v29, 7
    %v70 = vrot.slane %v30, 7
    %v71 = vsel %vm47, %v69, %v70
    %v88 = vsel %vm47, 0.0, %v48
    %v89 = vsel %vm47, 0.0, %v51
    %v90 = vsel %vm47, 0.0, %v54
    %v91 = vsel %vm47, 0.0, %v57
    %v92 = vsel %vm47, 0.0, %v60
    %v93 = vsel %vm47, 0.0, %v63
    %v94 = vsel %vm47, 0.0, %v66
    %v95 = vsel %vm47, 0.0, %v69
    %vm96 = vcmask 1046528
    %v97 = vrot.slane %v15, 1
    %v98 = vrot.slane %v16, 1
    %v99 = vsel %vm96, %v97, %v98
    %v100 = vrot.slane %v17, 1
    %v101 = vrot.slane %v18, 1
    %v102 = vsel %vm96, %v100, %v101
    %v103 = vrot.slane %v19, 1
    %v104 = vrot.slane %v20, 1
    %v105 = vsel %vm96, %v103, %v104
    %v106 = vrot.slane %v21, 1
    %v107 = vrot.slane %v22, 1
    %v108 = vsel %vm96, %v106, %v107
    %v109 = vrot.slane %v23, 1
    %v110 = vrot.slane %v24, 1
    %v111 = vsel %vm96, %v109, %v110
    %v112 = vrot.slane %v25, 1
    %v113 = vrot.slane %v26, 1
    %v114 = vsel %vm96, %v112, %v113
    %v115 = vrot.slane %v27, 1
    %v116 = vrot.slane %v28, 1
    %v117 = vsel %vm96, %v115, %v116
    %v118 = vrot.slane %v29, 1
    %v119 = vrot.slane %v30, 1
    %v120 = vsel %vm96, %v118, %v119
    %v129 = vsel %vm96, %v98, 0.0
    %v130 = vsel %vm96, %v101, 0.0
    %v131 = vsel %vm96, %v104, 0.0
    %v132 = vsel %vm96, %v107, 0.0
    %v133 = vsel %vm96, %v110, 0.0
    %v134 = vsel %vm96, %v113, 0.0
    %v135 = vsel %vm96, %v116, 0.0
    %v136 = vsel %vm96, %v119, 0.0
    %137 = vrot.lane.b32.xlu0 %v15, 60
    %v138 = vpop.permute.xlu0 %137
    %139 = vrot.lane.b32.xlu0 %v16, 60
    %v140 = vpop.permute.xlu0 %139
    %141 = vrot.lane.b32.xlu0 %v17, 60
    %v142 = vpop.permute.xlu0 %141
    %143 = vrot.lane.b32.xlu0 %v18, 60
    %v144 = vpop.permute.xlu0 %143
    %145 = vrot.lane.b32.xlu0 %v19, 60
    %v146 = vpop.permute.xlu0 %145
    %147 = vrot.lane.b32.xlu0 %v20, 60
    %v148 = vpop.permute.xlu0 %147
    %149 = vrot.lane.b32.xlu0 %v21, 60
    %v150 = vpop.permute.xlu0 %149
    %151 = vrot.lane.b32.xlu0 %v22, 60
    %v152 = vpop.permute.xlu0 %151
    %153 = vrot.lane.b32.xlu0 %v23, 60
    %v154 = vpop.permute.xlu0 %153
    %155 = vrot.lane.b32.xlu0 %v24, 60
    %v156 = vpop.permute.xlu0 %155
    %157 = vrot.lane.b32.xlu0 %v25, 60
    %v158 = vpop.permute.xlu0 %157
    %159 = vrot.lane.b32.xlu0 %v26, 60
    %v160 = vpop.permute.xlu0 %159
    %161 = vrot.lane.b32.xlu0 %v27, 60
    %v162 = vpop.permute.xlu0 %161
    %163 = vrot.lane.b32.xlu0 %v28, 60
    %v164 = vpop.permute.xlu0 %163
    %165 = vrot.lane.b32.xlu0 %v29, 60
    %v166 = vpop.permute.xlu0 %165
    %167 = vrot.lane.b32.xlu0 %v30, 60
    %v168 = vpop.permute.xlu0 %167
    %193 = vrot.lane.b32.xlu0 %v99, 120
    %v194 = vpop.permute.xlu0 %193
    %195 = vrot.lane.b32.xlu0 %v129, 120
    %v196 = vpop.permute.xlu0 %195
    %197 = vrot.lane.b32.xlu0 %v102, 120
    %v198 = vpop.permute.xlu0 %197
    %199 = vrot.lane.b32.xlu0 %v130, 120
    %v200 = vpop.permute.xlu0 %199
    %201 = vrot.lane.b32.xlu0 %v105, 120
    %v202 = vpop.permute.xlu0 %201
    %203 = vrot.lane.b32.xlu0 %v131, 120
    %v204 = vpop.permute.xlu0 %203
    %205 = vrot.lane.b32.xlu0 %v108, 120
    %v206 = vpop.permute.xlu0 %205
    %207 = vrot.lane.b32.xlu0 %v132, 120
    %v208 = vpop.permute.xlu0 %207
    %209 = vrot.lane.b32.xlu0 %v111, 120
    %v210 = vpop.permute.xlu0 %209
    %211 = vrot.lane.b32.xlu0 %v133, 120
    %v212 = vpop.permute.xlu0 %211
    %213 = vrot.lane.b32.xlu0 %v114, 120
    %v214 = vpop.permute.xlu0 %213
    %215 = vrot.lane.b32.xlu0 %v134, 120
    %v216 = vpop.permute.xlu0 %215
    %217 = vrot.lane.b32.xlu0 %v117, 120
    %v218 = vpop.permute.xlu0 %217
    %219 = vrot.lane.b32.xlu0 %v135, 120
    %v220 = vpop.permute.xlu0 %219
    %221 = vrot.lane.b32.xlu0 %v120, 120
    %v222 = vpop.permute.xlu0 %221
    %223 = vrot.lane.b32.xlu0 %v136, 120
    %v224 = vpop.permute.xlu0 %223
    %vm241 = vcmask 490496
    %v242 = vsel %vm241, %v88, %v138
    %v243 = vsel %vm241, %v50, %v140
    %v244 = vsel %vm241, %v89, %v142
    %v245 = vsel %vm241, %v53, %v144
    %v246 = vsel %vm241, %v90, %v146
    %v247 = vsel %vm241, %v56, %v148
    %v248 = vsel %vm241, %v91, %v150
    %v249 = vsel %vm241, %v59, %v152
    %v250 = vsel %vm241, %v92, %v154
    %v251 = vsel %vm241, %v62, %v156
    %v252 = vsel %vm241, %v93, %v158
    %v253 = vsel %vm241, %v65, %v160
    %v254 = vsel %vm241, %v94, %v162
    %v255 = vsel %vm241, %v68, %v164
    %v256 = vsel %vm241, %v95, %v166
    %v257 = vsel %vm241, %v71, %v168
    %vm258 = vcmask 982016
    %v259 = vsel %vm258, %v242, %v194
    %v260 = vsel %vm258, %v243, %v196
    %v261 = vsel %vm258, %v244, %v198
    %v262 = vsel %vm258, %v245, %v200
    %v263 = vsel %vm258, %v246, %v202
    %v264 = vsel %vm258, %v247, %v204
    %v265 = vsel %vm258, %v248, %v206
    %v266 = vsel %vm258, %v249, %v208
    %v267 = vsel %vm258, %v250, %v210
    %v268 = vsel %vm258, %v251, %v212
    %v269 = vsel %vm258, %v252, %v214
    %v270 = vsel %vm258, %v253, %v216
    %v271 = vsel %vm258, %v254, %v218
    %v272 = vsel %vm258, %v255, %v220
    %v273 = vsel %vm258, %v256, %v222
    %v274 = vsel %vm258, %v257, %v224
    %v275 = vld [vmem:[%s1] sm:$0xff]
    %v276 = vld [vmem:[%s1 + $0x8] sm:$0xff]
    %v277 = vld [vmem:[%s1 + $0x10] sm:$0xff]
    %v278 = vld [vmem:[%s1 + $0x18] sm:$0xff]
    %v279 = vld [vmem:[%s1 + $0x20] sm:$0xff]
    %v280 = vld [vmem:[%s1 + $0x28] sm:$0xff]
    %v281 = vld [vmem:[%s1 + $0x30] sm:$0xff]
    %v282 = vld [vmem:[%s1 + $0x38] sm:$0xff]
    %v283 = vld [vmem:[%s1 + $0x40] sm:$0xff]
    %v284 = vld [vmem:[%s1 + $0x48] sm:$0xff]
    %v285 = vld [vmem:[%s1 + $0x50] sm:$0xff]
    %v286 = vld [vmem:[%s1 + $0x58] sm:$0xff]
    %v287 = vld [vmem:[%s1 + $0x60] sm:$0xff]
    %v288 = vld [vmem:[%s1 + $0x68] sm:$0xff]
    %v289 = vld [vmem:[%s1 + $0x70] sm:$0xff]
    %v290 = vld [vmem:[%s1 + $0x78] sm:$0xff]
    %v291 = vld [vmem:[%s1 + $0x80] sm:$0xff]
    %v292 = vld [vmem:[%s1 + $0x88] sm:$0xff]
    %v293 = vld [vmem:[%s1 + $0x90] sm:$0xff]
    %v294 = vld [vmem:[%s1 + $0x98] sm:$0xff]
    %v295 = vld [vmem:[%s1 + $0xa0] sm:$0xff]
    %v296 = vld [vmem:[%s1 + $0xa8] sm:$0xff]
    %v297 = vld [vmem:[%s1 + $0xb0] sm:$0xf]
    %vm298 = vcmask 424960
    %v299 = vsel %vm298, %v194, 0
    %v301 = vsel %vm298, %v196, 0
    %v303 = vsel %vm298, %v198, 0
    %v305 = vsel %vm298, %v200, 0
    %v307 = vsel %vm298, %v202, 0
    %v309 = vsel %vm298, %v204, 0
    %v311 = vsel %vm298, %v206, 0
    %v313 = vsel %vm298, %v208, 0
    %v315 = vsel %vm298, %v210, 0
    %v317 = vsel %vm298, %v212, 0
    %v319 = vsel %vm298, %v214, 0
    %v321 = vsel %vm298, %v216, 0
    %v323 = vsel %vm298, %v218, 0
    %v325 = vsel %vm298, %v220, 0
    %v327 = vsel %vm298, %v222, 0
    %v329 = vsel %vm298, %v224, 0
    %vm331 = vcmask 1043456
    %v333 = vsel %vm331, %v297, 0
    %335 = vmatprep.subr.mxu0 0.0
    %336 = vmatpush1.msra.mxu0 %v290
    %337 = vmatprep.subr.mxu0 0.0
    %338 = vmatpush1.msra.mxu0 %v289
    %339 = vmatprep.subr.mxu0 0.0
    %340 = vmatpush1.msra.mxu0 %v288
    %341 = vmatprep.subr.mxu0 0.0
    %342 = vmatpush1.msra.mxu0 %v287
    %343 = vmatprep.subr.mxu0 0.0
    %344 = vmatpush1.msra.mxu0 %v286
    %345 = vmatprep.subr.mxu0 0.0
    %346 = vmatpush1.msra.mxu0 %v285
    %347 = vmatprep.subr.mxu0 0.0
    %348 = vmatpush1.msra.mxu0 %v284
    %349 = vmatprep.subr.mxu0 0.0
    %350 = vmatpush1.msra.mxu0 %v283
    %351 = vmatprep.subr.mxu0 0.0
    %352 = vmatpush1.msra.mxu0 %v282
    %353 = vmatprep.subr.mxu0 0.0
    %354 = vmatpush1.msra.mxu0 %v281
    %355 = vmatprep.subr.mxu0 0.0
    %356 = vmatpush1.msra.mxu0 %v280
    %357 = vmatprep.subr.mxu0 0.0
    %358 = vmatpush1.msra.mxu0 %v279
    %359 = vmatprep.subr.mxu0 0.0
    %360 = vmatpush1.msra.mxu0 %v278
    %361 = vmatprep.subr.mxu0 0.0
    %362 = vmatpush1.msra.mxu0 %v277
    %363 = vmatprep.subr.mxu0 0.0
    %364 = vmatpush1.msra.mxu0 %v276
    %365 = vmatprep.subr.mxu0 0.0
    %366 = vmatpush1.msra.mxu0 %v275
    %367 = vmatprep.subr.mxu0 0.0
    %368 = vmatpush2.msra.mxu0 0.0
    %369 = vmatprep.subr.mxu0 0.0
    %370 = vmatpush2.msra.mxu0 0.0
    %371 = vmatprep.subr.mxu0 0.0
    %372 = vmatpush2.msra.mxu0 0.0
    %373 = vmatprep.subr.mxu0 0.0
    %374 = vmatpush2.msra.mxu0 0.0
    %375 = vmatprep.subr.mxu0 0.0
    %376 = vmatpush2.msra.mxu0 0.0
    %377 = vmatprep.subr.mxu0 0.0
    %378 = vmatpush2.msra.mxu0 0.0
    %379 = vmatprep.subr.mxu0 0.0
    %380 = vmatpush2.msra.mxu0 0.0
    %381 = vmatprep.subr.mxu0 0.0
    %382 = vmatpush2.msra.mxu0 0.0
    %383 = vmatprep.subr.mxu0 0.0
    %384 = vmatpush2.msra.mxu0 0.0
    %385 = vmatprep.subr.mxu0 0.0
    %386 = vmatpush2.msra.mxu0 %v333
    %387 = vmatprep.subr.mxu0 0.0
    %388 = vmatpush2.msra.mxu0 %v296
    %389 = vmatprep.subr.mxu0 0.0
    %390 = vmatpush2.msra.mxu0 %v295
    %391 = vmatprep.subr.mxu0 0.0
    %392 = vmatpush2.msra.mxu0 %v294
    %393 = vmatprep.subr.mxu0 0.0
    %394 = vmatpush2.msra.mxu0 %v293
    %395 = vmatprep.subr.mxu0 0.0
    %396 = vmatpush2.msra.mxu0 %v292
    %397 = vmatprep.subr.mxu0 0.0
    %398 = vmatpush2.msra.mxu0 %v291
    %399 = vmatprep.mubr.f32.mxu0 %v299
    %400 = vmatmul.mubr.f32.gmra.mxu0 %v259
    %v401 = vpop.f32.mrf.mxu0
    %v402 = vadd.f32 0.0, %v401
    %v403 = vpop.f32.mrf.mxu0
    %404 = vmatprep.mubr.f32.mxu0 %v301
    %405 = vmatmul.mubr.f32.gmra.mxu0 %v260
    %v406 = vpop.f32.mrf.mxu0
    %v407 = vadd.f32 0.0, %v406
    %v408 = vpop.f32.mrf.mxu0
    %409 = vmatprep.mubr.f32.mxu0 %v303
    %410 = vmatmul.mubr.f32.gmra.mxu0 %v261
    %v411 = vpop.f32.mrf.mxu0
    %v412 = vadd.f32 0.0, %v411
    %v413 = vpop.f32.mrf.mxu0
    %414 = vmatprep.mubr.f32.mxu0 %v305
    %415 = vmatmul.mubr.f32.gmra.mxu0 %v262
    %v416 = vpop.f32.mrf.mxu0
    %v417 = vadd.f32 0.0, %v416
    %v418 = vpop.f32.mrf.mxu0
    %419 = vmatprep.mubr.f32.mxu0 %v307
    %420 = vmatmul.mubr.f32.gmra.mxu0 %v263
    %v421 = vpop.f32.mrf.mxu0
    %v422 = vadd.f32 0.0, %v421
    %v423 = vpop.f32.mrf.mxu0
    %424 = vmatprep.mubr.f32.mxu0 %v309
    %425 = vmatmul.mubr.f32.gmra.mxu0 %v264
    %v426 = vpop.f32.mrf.mxu0
    %v427 = vadd.f32 0.0, %v426
    %v428 = vpop.f32.mrf.mxu0
    %429 = vmatprep.mubr.f32.mxu0 %v311
    %430 = vmatmul.mubr.f32.gmra.mxu0 %v265
    %v431 = vpop.f32.mrf.mxu0
    %v432 = vadd.f32 0.0, %v431
    %v433 = vpop.f32.mrf.mxu0
    %434 = vmatprep.mubr.f32.mxu0 %v313
    %435 = vmatmul.mubr.f32.gmra.mxu0 %v266
    %v436 = vpop.f32.mrf.mxu0
    %v437 = vadd.f32 0.0, %v436
    %v438 = vpop.f32.mrf.mxu0
    %439 = vmatprep.mubr.f32.mxu0 %v315
    %440 = vmatmul.mubr.f32.gmra.mxu0 %v267
    %v441 = vpop.f32.mrf.mxu0
    %v442 = vadd.f32 0.0, %v441
    %v443 = vpop.f32.mrf.mxu0
    %444 = vmatprep.mubr.f32.mxu0 %v317
    %445 = vmatmul.mubr.f32.gmra.mxu0 %v268
    %v446 = vpop.f32.mrf.mxu0
    %v447 = vadd.f32 0.0, %v446
    %v448 = vpop.f32.mrf.mxu0
    %449 = vmatprep.mubr.f32.mxu0 %v319
    %450 = vmatmul.mubr.f32.gmra.mxu0 %v269
    %v451 = vpop.f32.mrf.mxu0
    %v452 = vadd.f32 0.0, %v451
    %v453 = vpop.f32.mrf.mxu0
    %454 = vmatprep.mubr.f32.mxu0 %v321
    %455 = vmatmul.mubr.f32.gmra.mxu0 %v270
    %v456 = vpop.f32.mrf.mxu0
    %v457 = vadd.f32 0.0, %v456
    %v458 = vpop.f32.mrf.mxu0
    %459 = vmatprep.mubr.f32.mxu0 %v323
    %460 = vmatmul.mubr.f32.gmra.mxu0 %v271
    %v461 = vpop.f32.mrf.mxu0
    %v462 = vadd.f32 0.0, %v461
    %v463 = vpop.f32.mrf.mxu0
    %464 = vmatprep.mubr.f32.mxu0 %v325
    %465 = vmatmul.mubr.f32.gmra.mxu0 %v272
    %v466 = vpop.f32.mrf.mxu0
    %v467 = vadd.f32 0.0, %v466
    %v468 = vpop.f32.mrf.mxu0
    %469 = vmatprep.mubr.f32.mxu0 %v327
    %470 = vmatmul.mubr.f32.gmra.mxu0 %v273
    %v471 = vpop.f32.mrf.mxu0
    %v472 = vadd.f32 0.0, %v471
    %v473 = vpop.f32.mrf.mxu0
    %474 = vmatprep.mubr.f32.mxu0 %v329
    %475 = vmatmul.mubr.f32.gmra.mxu0 %v274
    %v476 = vpop.f32.mrf.mxu0
    %v477 = vadd.f32 0.0, %v476
    %v478 = vpop.f32.mrf.mxu0
    %479 = vdwg.mxu0
    %vm480 = vcmask 261120
    %v481 = vsel %vm480, %v402, -inf
    %v482 = vsel %vm480, %v407, -inf
    %v483 = vmax.f32 %v481, %v482
    %v484 = vrot.slane %v483, 4
    %v485 = vmax.f32 %v483, %v484
    %v486 = vrot.slane %v485, 2
    %v487 = vmax.f32 %v485, %v486
    %v488 = vrot.slane %v487, 1
    %v489 = vmax.f32 %v487, %v488
    %v490 = vsel %vm480, %v412, -inf
    %v491 = vsel %vm480, %v417, -inf
    %v492 = vmax.f32 %v490, %v491
    %v493 = vrot.slane %v492, 4
    %v494 = vmax.f32 %v492, %v493
    %v495 = vrot.slane %v494, 2
    %v496 = vmax.f32 %v494, %v495
    %v497 = vrot.slane %v496, 1
    %v498 = vmax.f32 %v496, %v497
    %v499 = vsel %vm480, %v422, -inf
    %v500 = vsel %vm480, %v427, -inf
    %v501 = vmax.f32 %v499, %v500
    %v502 = vrot.slane %v501, 4
    %v503 = vmax.f32 %v501, %v502
    %v504 = vrot.slane %v503, 2
    %v505 = vmax.f32 %v503, %v504
    %v506 = vrot.slane %v505, 1
    %v507 = vmax.f32 %v505, %v506
    %v508 = vsel %vm480, %v432, -inf
    %v509 = vsel %vm480, %v437, -inf
    %v510 = vmax.f32 %v508, %v509
    %v511 = vrot.slane %v510, 4
    %v512 = vmax.f32 %v510, %v511
    %v513 = vrot.slane %v512, 2
    %v514 = vmax.f32 %v512, %v513
    %v515 = vrot.slane %v514, 1
    %v516 = vmax.f32 %v514, %v515
    %v517 = vsel %vm480, %v442, -inf
    %v518 = vsel %vm480, %v447, -inf
    %v519 = vmax.f32 %v517, %v518
    %v520 = vrot.slane %v519, 4
    %v521 = vmax.f32 %v519, %v520
    %v522 = vrot.slane %v521, 2
    %v523 = vmax.f32 %v521, %v522
    %v524 = vrot.slane %v523, 1
    %v525 = vmax.f32 %v523, %v524
    %v526 = vsel %vm480, %v452, -inf
    %v527 = vsel %vm480, %v457, -inf
    %v528 = vmax.f32 %v526, %v527
    %v529 = vrot.slane %v528, 4
    %v530 = vmax.f32 %v528, %v529
    %v531 = vrot.slane %v530, 2
    %v532 = vmax.f32 %v530, %v531
    %v533 = vrot.slane %v532, 1
    %v534 = vmax.f32 %v532, %v533
    %v535 = vsel %vm480, %v462, -inf
    %v536 = vsel %vm480, %v467, -inf
    %v537 = vmax.f32 %v535, %v536
    %v538 = vrot.slane %v537, 4
    %v539 = vmax.f32 %v537, %v538
    %v540 = vrot.slane %v539, 2
    %v541 = vmax.f32 %v539, %v540
    %v542 = vrot.slane %v541, 1
    %v543 = vmax.f32 %v541, %v542
    %v544 = vsel %vm480, %v472, -inf
    %v545 = vsel %vm480, %v477, -inf
    %v546 = vmax.f32 %v544, %v545
    %v547 = vrot.slane %v546, 4
    %v548 = vmax.f32 %v546, %v547
    %v549 = vrot.slane %v548, 2
    %v550 = vmax.f32 %v548, %v549
    %v551 = vrot.slane %v550, 1
    %v552 = vmax.f32 %v550, %v551
    %v553 = vld [vmem:[%s2] sm:$0x1]
    %v555 = vlaneseq
    %v556 = vshrl.u32 %v555, 7
    %v557 = vsub.s32 0, %v556
    %v558 = vrot.slane %v553, %v557
    %v560 = vadd.f32 %v489, %v558
    %v561 = vadd.f32 %v498, %v558
    %v562 = vadd.f32 %v507, %v558
    %v563 = vadd.f32 %v516, %v558
    %v564 = vadd.f32 %v525, %v558
    %v565 = vadd.f32 %v534, %v558
    %v566 = vadd.f32 %v543, %v558
    %v567 = vadd.f32 %v552, %v558
    %v568 = vmax.f32 %v560, 0.0
    %v569 = vmax.f32 %v561, 0.0
    %v570 = vmax.f32 %v562, 0.0
    %v571 = vmax.f32 %v563, 0.0
    %v572 = vmax.f32 %v564, 0.0
    %v573 = vmax.f32 %v565, 0.0
    %v574 = vmax.f32 %v566, 0.0
    %v575 = vmax.f32 %v567, 0.0
    %v584 = vrot.slane %v569, 7
    %vm585 = vcmask 1041409
    %v586 = vsel %vm585, %v584, %v568
    %v587 = vrot.slane %v570, 6
    %vm588 = vcmask 1042434
    %v589 = vsel %vm588, %v587, %v586
    %v590 = vrot.slane %v571, 5
    %vm591 = vcmask 1043459
    %v592 = vsel %vm591, %v590, %v589
    %v593 = vrot.slane %v572, 4
    %vm594 = vcmask 1044484
    %v595 = vsel %vm594, %v593, %v592
    %v596 = vrot.slane %v573, 3
    %vm597 = vcmask 1045509
    %v598 = vsel %vm597, %v596, %v595
    %v599 = vrot.slane %v574, 2
    %vm600 = vcmask 1046534
    %v601 = vsel %vm600, %v599, %v598
    %v602 = vrot.slane %v575, 1
    %vm603 = vcmask 1047559
    %v604 = vsel %vm603, %v602, %v601
    %606 = vst.msk [vmem:[#allocation2] sm:$0xff] %vm480, %v604
    // Predicated region
    $region14: #{tpu_custom_call.1} parent=1 // pred_check
      _
    $region15: #{tpu_custom_call.1} parent=1 // pred_check_branch
      %608 = sbr.rel (0) target = $region17
    $region16: #{tpu_custom_call.1} parent=1 // pred_region
      %s610 = ssub.s32 128, 128
      %611 = vsyncadd [#allocation3], %s610
      %s613 = sshll.u32 [#allocation2], 4
      %s614 = int_to_ptr.vmem [resolvable:$true] %s613
      %616 = dma.vmem_to_hbm [thread:$0]  %s614, 128, %s3, [#allocation3]
    $region17: #{tpu_custom_call.1} parent=1 // pred_fallthru
      _
    // Predicated region
    $region18: #{tpu_custom_call.1} parent=1 // pred_check
      _
    $region19: #{tpu_custom_call.1} parent=1 // pred_check_branch
      %618 = sbr.rel (0) target = $region21
    $region20: #{tpu_custom_call.1} parent=1 // pred_region
      %619 = dma.done [#allocation3], 128
    $region21: #{tpu_custom_call.1} parent=1 // pred_fallthru
      _
    %620 = vsyncpa [#allocation3], 1

</llo_original>
